<compile_context>
chip_gen: v6e
topology: v6e:2x2x1
jax: 0.10.0
libtpu: 0.0.40
codegen_flags: <defaults>
</compile_context>

<pallas_src>
import jax
import jax.numpy as jnp
from jax import lax
from jax.experimental import pallas as pl
from jax.experimental.pallas import tpu as pltpu


def _round_up(x, m):
    return (x + m - 1) // m * m


def _vmem_capacity_bytes():
    """Per-core VMEM capacity; conservative fallback (v7x = 64 MiB) if query fails."""
    try:
        return int(pltpu.get_tpu_info().vmem_capacity_bytes)
    except Exception:
        return 64 * 1024 * 1024


def _pick_batch_tile(B, D, vmem_budget_bytes):
    """Largest batch tile that fits the VMEM budget; at large B keep >=2 grid tiles
    so the 'parallel' batch axis can shard across v7x's two TensorCores."""
    # Rough per-row VMEM bytes: double-buffered f32 x block + in-kernel bf16 copy
    # + f32 h1/h2 temporaries + double-buffered f32 output row.
    per_row = 2 * 4 * D + 2 * D + 4 * (128 + 256) + 2 * 4
    max_rows = max(8, (vmem_budget_bytes // per_row) // 8 * 8)
    if B <= 1024:
        return min(_round_up(B, 8), max_rows)
    tb = 256
    for cand in (512, 1024, 2048, 4096):
        if cand <= max_rows and pl.cdiv(B, cand) >= 2:
            tb = cand
    return tb


def discriminator_kernel(x_ref, w1_ref, b1_ref, w2_ref, b2_ref, w3_ref, b3_ref, o_ref):
    # x_ref : [TB, D] f32   (one batch tile streamed from HBM; cast to bf16 here)
    # w1_ref: [D, 128] bf16, w2_ref: [128, 256] bf16   (pinned resident in VMEM)
    # w3_ref: [1, 256] f32,  biases f32
    # o_ref : [1, TB] f32   (lane-dense row of scores for this batch tile)
    x = x_ref[...].astype(jnp.bfloat16)

    # Layer 1 (MXU, bf16 inputs, f32 accumulation)
    h1 = jnp.dot(x, w1_ref[...], preferred_element_type=jnp.float32) + b1_ref[...]
    h1 = jnp.maximum(h1, 0.2 * h1)            # LeakyReLU(0.2): mul + max on the VPU

    # Layer 2 (MXU)
    h2 = jnp.dot(h1.astype(jnp.bfloat16), w2_ref[...],
                 preferred_element_type=jnp.float32) + b2_ref[...]
    h2 = jnp.maximum(h2, 0.2 * h2)

    # Layer 3 (256 -> 1), computed as w3 @ h2^T so the batch lands on the lane
    # dimension and the (1, TB) output block stores lane-dense (unmasked vst).
    h3 = lax.dot_general(w3_ref[...], h2, (((1,), (1,)), ((), ())),
                         preferred_element_type=jnp.float32) + b3_ref[...]

    # Numerically stable sigmoid (exp only of non-positive arguments).
    z = jnp.exp(-jnp.abs(h3))
    o_ref[...] = jnp.where(h3 >= 0, 1.0 / (1.0 + z), z / (1.0 + z))


def discriminator_forward(data, params):
    """data: any shape [B, ...]; flattened to [B, input_size] like data.view(B, -1)."""
    w1, b1, w2, b2, w3, b3 = params
    B = data.shape[0]
    x = data.reshape(B, -1).astype(jnp.float32)
    D = x.shape[1]
    assert D == w1.shape[0]

    # ---- per-generation tiling / VMEM budget ----
    vmem_cap = _vmem_capacity_bytes()
    vmem_limit = min(max(vmem_cap * 3 // 4, 32 * 1024 * 1024), 100 * 1024 * 1024)
    TB = _pick_batch_tile(B, D, vmem_limit // 2)
    B_pad = _round_up(B, TB)
    n_tiles = B_pad // TB

    # x streams straight from HBM in f32 (no full astype/pad pass); only pad the
    # ragged batch remainder when needed.
    if B_pad != B:
        x = jnp.pad(x, ((0, B_pad - B), (0, 0)))

    # Tiny weight/bias prep (cheap; O(D*128) at most). D is NOT padded -> the x
    # block's last dim equals the full array dim, so no column padding is needed.
    w1b = w1.astype(jnp.bfloat16)                 # (D, 128)
    w2b = w2.astype(jnp.bfloat16)                 # (128, 256)
    b1r = b1.reshape(1, 128).astype(jnp.float32)
    b2r = b2.reshape(1, 256).astype(jnp.float32)
    w3r = w3.reshape(1, 256).astype(jnp.float32)
    b3r = b3.reshape(1, 1).astype(jnp.float32)

    # Weights/biases: constant index_map -> stay resident in VMEM across tiles.
    def pinned(shape):
        return pl.BlockSpec(shape, lambda i, _n=len(shape): (0,) * _n)

    out = pl.pallas_call(
        discriminator_kernel,
        out_shape=jax.ShapeDtypeStruct((n_tiles, TB), jnp.float32),
        grid_spec=pltpu.PrefetchScalarGridSpec(
            num_scalar_prefetch=0,
            grid=(n_tiles,),
            in_specs=[
                pl.BlockSpec((TB, D), lambda i: (i, 0)),   # activations tiled over B
                pinned((D, 128)), pinned((1, 128)),
                pinned((128, 256)), pinned((1, 256)),
                pinned((1, 256)), pinned((1, 1)),
            ],
            out_specs=pl.BlockSpec((1, TB), lambda i: (i, 0)),   # lane-dense scores
        ),
        compiler_params=pltpu.CompilerParams(
            dimension_semantics=("parallel",),     # megacore sharding on v7x
            vmem_limit_bytes=vmem_limit,
        ),
    )(x, w1b, b1r, w2b, b2r, w3r, b3r)

    return out.reshape(B_pad, 1)[:B]


def init_params(key, input_size):
    """Deterministic init matching PyTorch nn.Linear default: U(-1/sqrt(fan_in), 1/sqrt(fan_in))."""
    dims = [(input_size, 128), (128, 256), (256, 1)]
    params = []
    for (fan_in, fan_out) in dims:
        key, kw, kb = jax.random.split(key, 3)
        bound = 1.0 / jnp.sqrt(float(fan_in))
        w = jax.random.uniform(kw, (fan_in, fan_out), jnp.float32, -bound, bound)
        b = jax.random.uniform(kb, (1, fan_out), jnp.float32, -bound, bound)
        params += [w, b]
    return tuple(params)


def reference_forward(data, params):
    """Plain-JAX reference with the same bf16/f32 mixed precision as the kernel."""
    w1, b1, w2, b2, w3, b3 = params
    x = data.reshape(data.shape[0], -1).astype(jnp.bfloat16)
    h1 = jnp.dot(x, w1.astype(jnp.bfloat16), preferred_element_type=jnp.float32) + b1
    h1 = jnp.maximum(h1, 0.2 * h1)
    h2 = jnp.dot(h1.astype(jnp.bfloat16), w2.astype(jnp.bfloat16),
                 preferred_element_type=jnp.float32) + b2
    h2 = jnp.maximum(h2, 0.2 * h2)
    h3 = jnp.dot(h2, w3, precision=lax.Precision.HIGHEST) + b3
    return jax.nn.sigmoid(h3)


if __name__ == "__main__":
    key = jax.random.PRNGKey(0)
    k_data, k_params = jax.random.split(key)

    # Small example: batch=8, "image" of shape [4, 4, 4] -> flattened input_size=64.
    B, C, H, W = 8, 4, 4, 4
    input_size = C * H * W
    data = jax.random.normal(k_data, (B, C, H, W), jnp.float32)

    params = init_params(k_params, input_size)

    out = jax.block_until_ready(discriminator_forward(data, params))
    ref = reference_forward(data, params)
    assert out.shape == (B, 1)
    assert jnp.allclose(out, ref, atol=5e-3, rtol=5e-3), "mismatch vs reference (B=8)"

    # Ragged batch: exercises wrapper-side padding of the ragged remainder.
    data2 = jax.random.normal(jax.random.PRNGKey(1), (5, C, H, W), jnp.float32)
    out2 = jax.block_until_ready(discriminator_forward(data2, params))
    ref2 = reference_forward(data2, params)
    assert out2.shape == (5, 1)
    assert jnp.allclose(out2, ref2, atol=5e-3, rtol=5e-3), "mismatch vs reference (B=5)"

    # Larger batch: exercises the multi-tile grid and lane-dense (1, TB) output path.
    data3 = jax.random.normal(jax.random.PRNGKey(2), (1536, C, H, W), jnp.float32)
    out3 = jax.block_until_ready(discriminator_forward(data3, params))
    ref3 = reference_forward(data3, params)
    assert out3.shape == (1536, 1)
    assert jnp.allclose(out3, ref3, atol=5e-3, rtol=5e-3), "mismatch vs reference (B=1536)"

    print("KERNEL_OK")
</pallas_src>

<mosaic_0001>
module attributes {stable_mosaic.version = 11 : i64} {
  func.func @discriminator_kernel(%arg0: i32, %arg1: memref<8x64xf32, #tpu.memory_space<vmem>>, %arg2: memref<64x128xbf16, #tpu.memory_space<vmem>>, %arg3: memref<1x128xf32, #tpu.memory_space<vmem>>, %arg4: memref<128x256xbf16, #tpu.memory_space<vmem>>, %arg5: memref<1x256xf32, #tpu.memory_space<vmem>>, %arg6: memref<1x256xf32, #tpu.memory_space<vmem>>, %arg7: memref<1x1xf32, #tpu.memory_space<vmem>>, %arg8: memref<1x8xf32, #tpu.memory_space<vmem>>) attributes {dimension_semantics = [#tpu.dimension_semantics<parallel>], iteration_bounds = array<i64: 1>, scalar_prefetch = 0 : i64, scratch_operands = 0 : i64, tpu.core_type = #tpu.core_type<tc>, window_params = [{transform_indices = @transform_0, window_bounds = array<i64: 8, 64>}, {pipeline_mode = #tpu.pipeline_mode<synchronous>, transform_indices = @transform_1, window_bounds = array<i64: 64, 128>}, {pipeline_mode = #tpu.pipeline_mode<synchronous>, transform_indices = @transform_2, window_bounds = array<i64: 1, 128>}, {pipeline_mode = #tpu.pipeline_mode<synchronous>, transform_indices = @transform_3, window_bounds = array<i64: 128, 256>}, {pipeline_mode = #tpu.pipeline_mode<synchronous>, transform_indices = @transform_4, window_bounds = array<i64: 1, 256>}, {pipeline_mode = #tpu.pipeline_mode<synchronous>, transform_indices = @transform_5, window_bounds = array<i64: 1, 256>}, {pipeline_mode = #tpu.pipeline_mode<synchronous>, transform_indices = @transform_6, window_bounds = array<i64: 1, 1>}, {transform_indices = @transform_7, window_bounds = array<i64: 1, 8>}]} {
    %c0 = arith.constant 0 : index
    %c0_0 = arith.constant 0 : index
    %0 = vector.load %arg1[%c0, %c0_0] : memref<8x64xf32, #tpu.memory_space<vmem>>, vector<8x64xf32>
    %1 = arith.truncf %0 : vector<8x64xf32> to vector<8x64xbf16>
    %c0_1 = arith.constant 0 : index
    %c0_2 = arith.constant 0 : index
    %2 = vector.load %arg2[%c0_1, %c0_2] : memref<64x128xbf16, #tpu.memory_space<vmem>>, vector<64x128xbf16>
    %cst = arith.constant dense<0.000000e+00> : vector<8x128xf32>
    %3 = tpu.matmul %1, %2, %cst {dimension_numbers = #tpu.dot_dimension_numbers<[1], [0], [0], [1], [0, 0, 1, 1], [], []>} : vector<8x64xbf16>, vector<64x128xbf16>, vector<8x128xf32> -> vector<8x128xf32>
    %c0_3 = arith.constant 0 : index
    %c0_4 = arith.constant 0 : index
    %4 = vector.load %arg3[%c0_3, %c0_4] : memref<1x128xf32, #tpu.memory_space<vmem>>, vector<1x128xf32>
    %5 = vector.broadcast %4 : vector<1x128xf32> to vector<8x128xf32>
    %6 = arith.addf %3, %5 : vector<8x128xf32>
    %cst_5 = arith.constant 2.000000e-01 : f32
    %7 = vector.broadcast %cst_5 : f32 to vector<8x128xf32>
    %8 = arith.mulf %7, %6 : vector<8x128xf32>
    %9 = arith.maximumf %6, %8 : vector<8x128xf32>
    %10 = arith.truncf %9 : vector<8x128xf32> to vector<8x128xbf16>
    %c0_6 = arith.constant 0 : index
    %c0_7 = arith.constant 0 : index
    %11 = vector.load %arg4[%c0_6, %c0_7] : memref<128x256xbf16, #tpu.memory_space<vmem>>, vector<128x256xbf16>
    %cst_8 = arith.constant dense<0.000000e+00> : vector<8x256xf32>
    %12 = tpu.matmul %10, %11, %cst_8 {dimension_numbers = #tpu.dot_dimension_numbers<[1], [0], [0], [1], [0, 0, 1, 1], [], []>} : vector<8x128xbf16>, vector<128x256xbf16>, vector<8x256xf32> -> vector<8x256xf32>
    %c0_9 = arith.constant 0 : index
    %c0_10 = arith.constant 0 : index
    %13 = vector.load %arg5[%c0_9, %c0_10] : memref<1x256xf32, #tpu.memory_space<vmem>>, vector<1x256xf32>
    %14 = vector.broadcast %13 : vector<1x256xf32> to vector<8x256xf32>
    %15 = arith.addf %12, %14 : vector<8x256xf32>
    %cst_11 = arith.constant 2.000000e-01 : f32
    %16 = vector.broadcast %cst_11 : f32 to vector<8x256xf32>
    %17 = arith.mulf %16, %15 : vector<8x256xf32>
    %18 = arith.maximumf %15, %17 : vector<8x256xf32>
    %c0_12 = arith.constant 0 : index
    %c0_13 = arith.constant 0 : index
    %19 = vector.load %arg6[%c0_12, %c0_13] : memref<1x256xf32, #tpu.memory_space<vmem>>, vector<1x256xf32>
    %cst_14 = arith.constant dense<0.000000e+00> : vector<1x8xf32>
    %20 = tpu.matmul %19, %18, %cst_14 {dimension_numbers = #tpu.dot_dimension_numbers<[1], [1], [0], [0], [0, 0, 1, 0], [], []>} : vector<1x256xf32>, vector<8x256xf32>, vector<1x8xf32> -> vector<1x8xf32>
    %c0_15 = arith.constant 0 : index
    %c0_16 = arith.constant 0 : index
    %21 = vector.load %arg7[%c0_15, %c0_16] : memref<1x1xf32, #tpu.memory_space<vmem>>, vector<1x1xf32>
    %22 = vector.broadcast %21 : vector<1x1xf32> to vector<1x8xf32>
    %23 = arith.addf %20, %22 : vector<1x8xf32>
    %24 = math.absf %23 : vector<1x8xf32>
    %cst_17 = arith.constant 0.000000e+00 : f32
    %25 = vector.broadcast %cst_17 : f32 to vector<1x8xf32>
    %26 = arith.subf %25, %24 : vector<1x8xf32>
    %27 = math.exp %26 : vector<1x8xf32>
    %cst_18 = arith.constant 0.000000e+00 : f32
    %28 = vector.broadcast %cst_18 : f32 to vector<1x8xf32>
    %29 = arith.cmpf oge, %23, %28 : vector<1x8xf32>
    %cst_19 = arith.constant 1.000000e+00 : f32
    %30 = vector.broadcast %cst_19 : f32 to vector<1x8xf32>
    %31 = arith.addf %30, %27 : vector<1x8xf32>
    %cst_20 = arith.constant 1.000000e+00 : f32
    %32 = vector.broadcast %cst_20 : f32 to vector<1x8xf32>
    %33 = arith.divf %32, %31 : vector<1x8xf32>
    %cst_21 = arith.constant 1.000000e+00 : f32
    %34 = vector.broadcast %cst_21 : f32 to vector<1x8xf32>
    %35 = arith.addf %34, %27 : vector<1x8xf32>
    %36 = arith.divf %27, %35 : vector<1x8xf32>
    %37 = arith.select %29, %33, %36 : vector<1x8xi1>, vector<1x8xf32>
    %c0_22 = arith.constant 0 : index
    %c0_23 = arith.constant 0 : index
    %38 = vector.load %arg8[%c0_22, %c0_23] : memref<1x8xf32, #tpu.memory_space<vmem>>, vector<1x8xf32>
    tpu.vector_store %arg8[%c0_22, %c0_23], %37 {strides = array<i32>} : memref<1x8xf32, #tpu.memory_space<vmem>>, vector<1x8xf32>,
    return
  }
  func.func @transform_0(%arg0: i32) -> (i32, i32) {
    %c0_i32 = arith.constant 0 : i32
    %c0_i32_0 = arith.constant 0 : i32
    return %arg0, %c0_i32 : i32, i32
  }
  func.func @transform_1(%arg0: i32) -> (i32, i32) {
    %c0_i32 = arith.constant 0 : i32
    %c0_i32_0 = arith.constant 0 : i32
    %c0_i32_1 = arith.constant 0 : i32
    return %c0_i32, %c0_i32_0 : i32, i32
  }
  func.func @transform_2(%arg0: i32) -> (i32, i32) {
    %c0_i32 = arith.constant 0 : i32
    %c0_i32_0 = arith.constant 0 : i32
    %c0_i32_1 = arith.constant 0 : i32
    return %c0_i32, %c0_i32_0 : i32, i32
  }
  func.func @transform_3(%arg0: i32) -> (i32, i32) {
    %c0_i32 = arith.constant 0 : i32
    %c0_i32_0 = arith.constant 0 : i32
    %c0_i32_1 = arith.constant 0 : i32
    return %c0_i32, %c0_i32_0 : i32, i32
  }
  func.func @transform_4(%arg0: i32) -> (i32, i32) {
    %c0_i32 = arith.constant 0 : i32
    %c0_i32_0 = arith.constant 0 : i32
    %c0_i32_1 = arith.constant 0 : i32
    return %c0_i32, %c0_i32_0 : i32, i32
  }
  func.func @transform_5(%arg0: i32) -> (i32, i32) {
    %c0_i32 = arith.constant 0 : i32
    %c0_i32_0 = arith.constant 0 : i32
    %c0_i32_1 = arith.constant 0 : i32
    return %c0_i32, %c0_i32_0 : i32, i32
  }
  func.func @transform_6(%arg0: i32) -> (i32, i32) {
    %c0_i32 = arith.constant 0 : i32
    %c0_i32_0 = arith.constant 0 : i32
    %c0_i32_1 = arith.constant 0 : i32
    return %c0_i32, %c0_i32_0 : i32, i32
  }
  func.func @transform_7(%arg0: i32) -> (i32, i32) {
    %c0_i32 = arith.constant 0 : i32
    %c0_i32_0 = arith.constant 0 : i32
    return %arg0, %c0_i32 : i32, i32
  }
}

</mosaic_0001>

<llo_original>
// kernel: tpu_custom_call.1
$region0: #{tpu_custom_call.1}
  #allocation0 [shape = 'u32[]', space=smem, size = 0x4, offset = 0x4, fixed_abs, tag = 'smem constant byte address 0x4 - core index']
  #allocation1 [shape = 'u32[144,128]{1,0:T(1,128)}', space=vmem, size = 0x12000, scoped, tag = 'internal scratch']
  #allocation2 [shape = 'f32[1,1]{1,0:T(1,128)S(1)}', space=vmem, size = 0x200, scoped, tag = 'scoped memory for tpu_custom_call.1']
  %s0 = inlined_call_operand.hbm [shape: f32[8,64], index: 0, kind: input, shape index: {}]
  %s1 = inlined_call_operand.hbm [shape: bf16[64,128], index: 1, kind: input, shape index: {}]
  %s2 = inlined_call_operand.vmem [shape: f32[1,128], index: 2, kind: input, shape index: {}]
  %s3 = inlined_call_operand.hbm [shape: bf16[128,256], index: 3, kind: input, shape index: {}]
  %s4 = inlined_call_operand.vmem [shape: f32[1,256], index: 4, kind: input, shape index: {}]
  %s5 = inlined_call_operand.vmem [shape: f32[1,256], index: 5, kind: input, shape index: {}]
  %s6 = inlined_call_operand.<no memory space> [shape: f32[1,1], index: 6, kind: input, shape index: {}]
  %s7 = inlined_call_operand.hbm [shape: f32[1,8], index: 7, kind: output, shape index: {}]
  %s8 = sld [smem:[#allocation0]]
  $region50: #{tpu_custom_call.1} parent=0
    _
  %s10 = ssub.s32 1, %s8
  %s11 = scalar_select 0, %s10, %s8
  %v12 = vstv %s6
  %13 = vst [vmem:[#allocation2] sm:$0x1] %v12
  $region1: #{tpu_custom_call.1} parent=0
    #allocation3 [shape = 'u8[4096]{0}', space=vmem, size = 0x1000, scoped, tag = 'input window, operand 0, single buffered']
    #allocation4 [shape = 's32[1]{0}', space=sflag, size = 0x4, scoped, tag = 'scoped memory for tpu_custom_call.1']
    #allocation5 [shape = 's32[1]{0}', space=sflag, size = 0x4, scoped, tag = 'scoped memory for tpu_custom_call.1']
    #allocation6 [shape = 'u8[16384]{0}', space=vmem, size = 0x4000, scoped, tag = 'input window, operand 1, single buffered']
    #allocation7 [shape = 's32[1]{0}', space=sflag, size = 0x4, scoped, tag = 'scoped memory for tpu_custom_call.1']
    #allocation8 [shape = 'u8[65536]{0}', space=vmem, size = 0x10000, scoped, tag = 'input window, operand 3, single buffered']
    #allocation9 [shape = 'u8[512]{0}', space=vmem, size = 0x400, scoped, tag = 'output window, operand 0, single buffered']
    %14 = vsyncpa [#allocation4], 0
    %15 = vsyncpa [#allocation7], 0
    %16 = vsyncpa [#allocation5], 0
    // Predicated region
    $region2: #{tpu_custom_call.1} parent=1 // pred_check
      _
    $region3: #{tpu_custom_call.1} parent=1 // pred_check_branch
      %18 = sbr.rel (0) target = $region5
    $region4: #{tpu_custom_call.1} parent=1 // pred_region
      %s20 = ssub.s32 128, 128
      %21 = vsyncadd [#allocation4], %s20
      %s23 = sshll.u32 [#allocation3], 4
      %s24 = int_to_ptr.vmem [resolvable:$true] %s23
      %26 = dma.hbm_to_vmem [thread:$0]  %s0, 128, %s24, [#allocation4]
    $region5: #{tpu_custom_call.1} parent=1 // pred_fallthru
      _
    // Predicated region
    $region6: #{tpu_custom_call.1} parent=1 // pred_check
      _
    $region7: #{tpu_custom_call.1} parent=1 // pred_check_branch
      %28 = sbr.rel (0) target = $region9
    $region8: #{tpu_custom_call.1} parent=1 // pred_region
      %s30 = ssub.s32 512, 512
      %31 = vsyncadd [#allocation7], %s30
      %s32 = sshll.u32 [#allocation6], 4
      %s33 = int_to_ptr.vmem [resolvable:$true] %s32
      %38 = dma.hbm_to_vmem [thread:$0]  %s1, 512, %s33, [#allocation7], 64, 64, 4
    $region9: #{tpu_custom_call.1} parent=1 // pred_fallthru
      _
    // Predicated region
    $region10: #{tpu_custom_call.1} parent=1 // pred_check
      _
    $region11: #{tpu_custom_call.1} parent=1 // pred_check_branch
      %40 = sbr.rel (0) target = $region13
    $region12: #{tpu_custom_call.1} parent=1 // pred_region
      _
    $region13: #{tpu_custom_call.1} parent=1 // pred_fallthru
      _
    // Predicated region
    $region14: #{tpu_custom_call.1} parent=1 // pred_check
      _
    $region15: #{tpu_custom_call.1} parent=1 // pred_check_branch
      %42 = sbr.rel (0) target = $region17
    $region16: #{tpu_custom_call.1} parent=1 // pred_region
      %s44 = ssub.s32 2048, 2048
      %45 = vsyncadd [#allocation7], %s44
      %s46 = sshll.u32 [#allocation8], 4
      %s47 = int_to_ptr.vmem [resolvable:$true] %s46
      %52 = dma.hbm_to_vmem [thread:$0]  %s3, 2048, %s47, [#allocation7], 128, 128, 8
    $region17: #{tpu_custom_call.1} parent=1 // pred_fallthru
      _
    // Predicated region
    $region18: #{tpu_custom_call.1} parent=1 // pred_check
      _
    $region19: #{tpu_custom_call.1} parent=1 // pred_check_branch
      %54 = sbr.rel (0) target = $region21
    $region20: #{tpu_custom_call.1} parent=1 // pred_region
      _
    $region21: #{tpu_custom_call.1} parent=1 // pred_fallthru
      _
    // Predicated region
    $region22: #{tpu_custom_call.1} parent=1 // pred_check
      _
    $region23: #{tpu_custom_call.1} parent=1 // pred_check_branch
      %56 = sbr.rel (0) target = $region25
    $region24: #{tpu_custom_call.1} parent=1 // pred_region
      _
    $region25: #{tpu_custom_call.1} parent=1 // pred_fallthru
      _
    // Predicated region
    $region26: #{tpu_custom_call.1} parent=1 // pred_check
      _
    $region27: #{tpu_custom_call.1} parent=1 // pred_check_branch
      %58 = sbr.rel (0) target = $region29
    $region28: #{tpu_custom_call.1} parent=1 // pred_region
      _
    $region29: #{tpu_custom_call.1} parent=1 // pred_fallthru
      _
    // Predicated region
    $region30: #{tpu_custom_call.1} parent=1 // pred_check
      _
    $region31: #{tpu_custom_call.1} parent=1 // pred_check_branch
      %60 = sbr.rel (0) target = $region33
    $region32: #{tpu_custom_call.1} parent=1 // pred_region
      %61 = dma.done [#allocation4], 128
    $region33: #{tpu_custom_call.1} parent=1 // pred_fallthru
      _
    // Predicated region
    $region34: #{tpu_custom_call.1} parent=1 // pred_check
      _
    $region35: #{tpu_custom_call.1} parent=1 // pred_check_branch
      %63 = sbr.rel (0) target = $region37
    $region36: #{tpu_custom_call.1} parent=1 // pred_region
      %64 = dma.done [#allocation7], 512
    $region37: #{tpu_custom_call.1} parent=1 // pred_fallthru
      _
    // Predicated region
    $region38: #{tpu_custom_call.1} parent=1 // pred_check
      _
    $region39: #{tpu_custom_call.1} parent=1 // pred_check_branch
      %66 = sbr.rel (0) target = $region41
    $region40: #{tpu_custom_call.1} parent=1 // pred_region
      %67 = dma.done [#allocation7], 2048
    $region41: #{tpu_custom_call.1} parent=1 // pred_fallthru
      _
    %v69 = vld [vmem:[#allocation3] sm:$0xff]
    %v70 = vpack.c.bf16 %v69, %v69
    %v71 = vld [vmem:[#allocation6] sm:$0xf]
    %v72 = vld [vmem:[#allocation6 + $0x4] sm:$0xf]
    %v73 = vld [vmem:[#allocation6 + $0x8] sm:$0xf]
    %v74 = vld [vmem:[#allocation6 + $0xc] sm:$0xf]
    %v75 = vld [vmem:[#allocation6 + $0x10] sm:$0xf]
    %v76 = vld [vmem:[#allocation6 + $0x14] sm:$0xf]
    %v77 = vld [vmem:[#allocation6 + $0x18] sm:$0xf]
    %v78 = vld [vmem:[#allocation6 + $0x1c] sm:$0xf]
    %v79 = vld [vmem:[%s2] sm:$0x1]
    %v81 = vlaneseq
    %v82 = vshrl.u32 %v81, 7
    %v83 = vsub.s32 0, %v82
    %v84 = vrot.slane %v79, %v83
    %v94 = vunpack.c.l.b16 %v71
    %v95 = vunpack.c.l.b16 %v72
    %v96 = vunpack.c.l.b16 %v73
    %v97 = vunpack.c.l.b16 %v74
    %v98 = vunpack.c.l.b16 %v75
    %v99 = vunpack.c.l.b16 %v76
    %v100 = vunpack.c.l.b16 %v77
    %v101 = vunpack.c.l.b16 %v78
    %v102 = vpack.c.b16 %v95, %v94
    %v103 = vpack.c.b16 %v97, %v96
    %v104 = vpack.c.b16 %v99, %v98
    %v105 = vpack.c.b16 %v101, %v100
    %vm110 = vcmask 523264
    %v112 = vsel %vm110, %v70, 0
    %114 = vmatprep.subr.bf16.mxu0 0
    %115 = vmatpush1.bf16.msra.mxu0 0
    %116 = vmatprep.subr.bf16.mxu0 0
    %117 = vmatpush1.bf16.msra.mxu0 0
    %118 = vmatprep.subr.bf16.mxu0 0
    %119 = vmatpush1.bf16.msra.mxu0 0
    %120 = vmatprep.subr.bf16.mxu0 0
    %121 = vmatpush1.bf16.msra.mxu0 0
    %122 = vmatprep.subr.bf16.mxu0 0
    %123 = vmatpush1.bf16.msra.mxu0 %v105
    %124 = vmatprep.subr.bf16.mxu0 0
    %125 = vmatpush1.bf16.msra.mxu0 %v104
    %126 = vmatprep.subr.bf16.mxu0 0
    %127 = vmatpush1.bf16.msra.mxu0 %v103
    %128 = vmatprep.subr.bf16.mxu0 0
    %129 = vmatpush1.bf16.msra.mxu0 %v102
    %130 = vmatprep.subr.bf16.mxu0 0
    %131 = vmatpush2.bf16.msra.mxu0 0
    %132 = vmatprep.subr.bf16.mxu0 0
    %133 = vmatpush2.bf16.msra.mxu0 0
    %134 = vmatprep.subr.bf16.mxu0 0
    %135 = vmatpush2.bf16.msra.mxu0 0
    %136 = vmatprep.subr.bf16.mxu0 0
    %137 = vmatpush2.bf16.msra.mxu0 0
    %138 = vmatprep.subr.bf16.mxu0 0
    %139 = vmatpush2.bf16.msra.mxu0 0
    %140 = vmatprep.subr.bf16.mxu0 0
    %141 = vmatpush2.bf16.msra.mxu0 0
    %142 = vmatprep.subr.bf16.mxu0 0
    %143 = vmatpush2.bf16.msra.mxu0 0
    %144 = vmatprep.subr.bf16.mxu0 0
    %145 = vmatpush2.bf16.msra.mxu0 0
    %146 = vmatprep.mubr.bf16.mxu0 0
    %147 = vmatmul.mubr.bf16.gmra.mxu0 %v112
    %v148 = vpop.f32.mrf.mxu0
    %v149 = vadd.f32 %v84, %v148
    %v150 = vpop.f32.mrf.mxu0
    %v151 = vpop.f32.mrf.mxu0
    %v152 = vpop.f32.mrf.mxu0
    %153 = vdwg.mxu0
    %v154 = vmul.f32 %v149, 0.2
    %v155 = vmax.f32 %v149, %v154
    %v156 = vpack.c.bf16 %v155, %v155
    %v157 = vld [vmem:[#allocation8] sm:$0xff]
    %v158 = vld [vmem:[#allocation8 + $0x8] sm:$0xff]
    %v159 = vld [vmem:[#allocation8 + $0x10] sm:$0xff]
    %v160 = vld [vmem:[#allocation8 + $0x18] sm:$0xff]
    %v161 = vld [vmem:[#allocation8 + $0x20] sm:$0xff]
    %v162 = vld [vmem:[#allocation8 + $0x28] sm:$0xff]
    %v163 = vld [vmem:[#allocation8 + $0x30] sm:$0xff]
    %v164 = vld [vmem:[#allocation8 + $0x38] sm:$0xff]
    %v165 = vld [vmem:[#allocation8 + $0x40] sm:$0xff]
    %v166 = vld [vmem:[#allocation8 + $0x48] sm:$0xff]
    %v167 = vld [vmem:[#allocation8 + $0x50] sm:$0xff]
    %v168 = vld [vmem:[#allocation8 + $0x58] sm:$0xff]
    %v169 = vld [vmem:[#allocation8 + $0x60] sm:$0xff]
    %v170 = vld [vmem:[#allocation8 + $0x68] sm:$0xff]
    %v171 = vld [vmem:[#allocation8 + $0x70] sm:$0xff]
    %v172 = vld [vmem:[#allocation8 + $0x78] sm:$0xff]
    %v173 = vld [vmem:[%s4] sm:$0x3]
    %v175 = vlaneseq
    %v176 = vshrl.u32 %v175, 7
    %v177 = vsub.s32 0, %v176
    %v178 = vrot.slane %v173, %v177
    %v179 = vlaneseq
    %v180 = vshrl.u32 %v179, 7
    %v181 = vsub.s32 1, %v180
    %v182 = vrot.slane %v173, %v181
    %v201 = vunpack.c.l.b16 %v157
    %v202 = vunpack.c.h.b16 %v157
    %v203 = vunpack.c.l.b16 %v158
    %v204 = vunpack.c.h.b16 %v158
    %v205 = vunpack.c.l.b16 %v159
    %v206 = vunpack.c.h.b16 %v159
    %v207 = vunpack.c.l.b16 %v160
    %v208 = vunpack.c.h.b16 %v160
    %v209 = vunpack.c.l.b16 %v161
    %v210 = vunpack.c.h.b16 %v161
    %v211 = vunpack.c.l.b16 %v162
    %v212 = vunpack.c.h.b16 %v162
    %v213 = vunpack.c.l.b16 %v163
    %v214 = vunpack.c.h.b16 %v163
    %v215 = vunpack.c.l.b16 %v164
    %v216 = vunpack.c.h.b16 %v164
    %v217 = vunpack.c.l.b16 %v165
    %v218 = vunpack.c.h.b16 %v165
    %v219 = vunpack.c.l.b16 %v166
    %v220 = vunpack.c.h.b16 %v166
    %v221 = vunpack.c.l.b16 %v167
    %v222 = vunpack.c.h.b16 %v167
    %v223 = vunpack.c.l.b16 %v168
    %v224 = vunpack.c.h.b16 %v168
    %v225 = vunpack.c.l.b16 %v169
    %v226 = vunpack.c.h.b16 %v169
    %v227 = vunpack.c.l.b16 %v170
    %v228 = vunpack.c.h.b16 %v170
    %v229 = vunpack.c.l.b16 %v171
    %v230 = vunpack.c.h.b16 %v171
    %v231 = vunpack.c.l.b16 %v172
    %v232 = vunpack.c.h.b16 %v172
    %v233 = vpack.c.b16 %v203, %v201
    %v234 = vpack.c.b16 %v204, %v202
    %v235 = vpack.c.b16 %v207, %v205
    %v236 = vpack.c.b16 %v208, %v206
    %v237 = vpack.c.b16 %v211, %v209
    %v238 = vpack.c.b16 %v212, %v210
    %v239 = vpack.c.b16 %v215, %v213
    %v240 = vpack.c.b16 %v216, %v214
    %v241 = vpack.c.b16 %v219, %v217
    %v242 = vpack.c.b16 %v220, %v218
    %v243 = vpack.c.b16 %v223, %v221
    %v244 = vpack.c.b16 %v224, %v222
    %v245 = vpack.c.b16 %v227, %v225
    %v246 = vpack.c.b16 %v228, %v226
    %v247 = vpack.c.b16 %v231, %v229
    %v248 = vpack.c.b16 %v232, %v230
    %265 = vmatprep.subr.bf16.mxu0 %v248
    %266 = vmatpush1.bf16.msra.mxu0 %v247
    %267 = vmatprep.subr.bf16.mxu0 %v246
    %268 = vmatpush1.bf16.msra.mxu0 %v245
    %269 = vmatprep.subr.bf16.mxu0 %v244
    %270 = vmatpush1.bf16.msra.mxu0 %v243
    %271 = vmatprep.subr.bf16.mxu0 %v242
    %272 = vmatpush1.bf16.msra.mxu0 %v241
    %273 = vmatprep.subr.bf16.mxu0 %v240
    %274 = vmatpush1.bf16.msra.mxu0 %v239
    %275 = vmatprep.subr.bf16.mxu0 %v238
    %276 = vmatpush1.bf16.msra.mxu0 %v237
    %277 = vmatprep.subr.bf16.mxu0 %v236
    %278 = vmatpush1.bf16.msra.mxu0 %v235
    %279 = vmatprep.subr.bf16.mxu0 %v234
    %280 = vmatpush1.bf16.msra.mxu0 %v233
    %281 = vmatprep.subr.bf16.mxu0 0
    %282 = vmatpush2.bf16.msra.mxu0 0
    %283 = vmatprep.subr.bf16.mxu0 0
    %284 = vmatpush2.bf16.msra.mxu0 0
    %285 = vmatprep.subr.bf16.mxu0 0
    %286 = vmatpush2.bf16.msra.mxu0 0
    %287 = vmatprep.subr.bf16.mxu0 0
    %288 = vmatpush2.bf16.msra.mxu0 0
    %289 = vmatprep.subr.bf16.mxu0 0
    %290 = vmatpush2.bf16.msra.mxu0 0
    %291 = vmatprep.subr.bf16.mxu0 0
    %292 = vmatpush2.bf16.msra.mxu0 0
    %293 = vmatprep.subr.bf16.mxu0 0
    %294 = vmatpush2.bf16.msra.mxu0 0
    %295 = vmatprep.subr.bf16.mxu0 0
    %296 = vmatpush2.bf16.msra.mxu0 0
    %297 = vmatprep.mubr.bf16.mxu0 0
    %298 = vmatmul.mubr.bf16.gmra.mxu0 %v156
    %v299 = vpop.f32.mrf.mxu0
    %v300 = vadd.f32 %v178, %v299
    %v301 = vpop.f32.mrf.mxu0
    %v302 = vadd.f32 %v182, %v301
    %v303 = vpop.f32.mrf.mxu0
    %v304 = vpop.f32.mrf.mxu0
    %305 = vdwg.mxu0
    %v306 = vmul.f32 %v300, 0.2
    %v307 = vmul.f32 %v302, 0.2
    %v308 = vmax.f32 %v300, %v306
    %v309 = vmax.f32 %v302, %v307
    %v310 = vld [vmem:[%s5] sm:$0x3]
    %v311 = vld [vmem:[#allocation2] sm:$0x1]
    %313 = vset.pattern.permute.xlu0 0
    %314 = vperm.xlu0 %313, %v311
    %v315 = vpop.permute.xlu0 %314
    %v317 = vlaneseq
    %v318 = vshrl.u32 %v317, 7
    %v319 = vsub.s32 0, %v318
    %v320 = vrot.slane %v315, %v319
    %v322 = vlaneseq
    %v323 = vshrl.u32 %v322, 7
    %v324 = vsub.s32 0, %v323
    %v325 = vrot.slane %v310, %v324
    %v326 = vlaneseq
    %v327 = vshrl.u32 %v326, 7
    %v328 = vsub.s32 1, %v327
    %v329 = vrot.slane %v310, %v328
    %332 = vmatprep.subr.mxu0 0.0
    %333 = vmatpush1.xpose.msra.mxu0 0.0
    %334 = vmatprep.subr.mxu0 0.0
    %335 = vmatpush1.xpose.msra.mxu0 0.0
    %336 = vmatprep.subr.mxu0 0.0
    %337 = vmatpush1.xpose.msra.mxu0 0.0
    %338 = vmatprep.subr.mxu0 0.0
    %339 = vmatpush1.xpose.msra.mxu0 0.0
    %340 = vmatprep.subr.mxu0 0.0
    %341 = vmatpush1.xpose.msra.mxu0 0.0
    %342 = vmatprep.subr.mxu0 0.0
    %343 = vmatpush1.xpose.msra.mxu0 0.0
    %344 = vmatprep.subr.mxu0 0.0
    %345 = vmatpush1.xpose.msra.mxu0 0.0
    %346 = vmatprep.subr.mxu0 0.0
    %347 = vmatpush1.xpose.msra.mxu0 0.0
    %348 = vmatprep.subr.mxu0 0.0
    %349 = vmatpush1.xpose.msra.mxu0 0.0
    %350 = vmatprep.subr.mxu0 0.0
    %351 = vmatpush1.xpose.msra.mxu0 0.0
    %352 = vmatprep.subr.mxu0 0.0
    %353 = vmatpush1.xpose.msra.mxu0 0.0
    %354 = vmatprep.subr.mxu0 0.0
    %355 = vmatpush1.xpose.msra.mxu0 0.0
    %356 = vmatprep.subr.mxu0 0.0
    %357 = vmatpush1.xpose.msra.mxu0 0.0
    %358 = vmatprep.subr.mxu0 0.0
    %359 = vmatpush1.xpose.msra.mxu0 0.0
    %360 = vmatprep.subr.mxu0 0.0
    %361 = vmatpush1.xpose.msra.mxu0 0.0
    %362 = vmatprep.subr.mxu0 %v309
    %363 = vmatpush1.xpose.msra.mxu0 %v308
    %364 = vmatprep.subr.mxu0 0.0
    %365 = vmatpush2.xpose.msra.mxu0 0.0
    %366 = vmatprep.subr.mxu0 0.0
    %367 = vmatpush2.xpose.msra.mxu0 0.0
    %368 = vmatprep.subr.mxu0 0.0
    %369 = vmatpush2.xpose.msra.mxu0 0.0
    %370 = vmatprep.subr.mxu0 0.0
    %371 = vmatpush2.xpose.msra.mxu0 0.0
    %372 = vmatprep.subr.mxu0 0.0
    %373 = vmatpush2.xpose.msra.mxu0 0.0
    %374 = vmatprep.subr.mxu0 0.0
    %375 = vmatpush2.xpose.msra.mxu0 0.0
    %376 = vmatprep.subr.mxu0 0.0
    %377 = vmatpush2.xpose.msra.mxu0 0.0
    %378 = vmatprep.subr.mxu0 0.0
    %379 = vmatpush2.xpose.msra.mxu0 0.0
    %380 = vmatprep.subr.mxu0 0.0
    %381 = vmatpush2.xpose.msra.mxu0 0.0
    %382 = vmatprep.subr.mxu0 0.0
    %383 = vmatpush2.xpose.msra.mxu0 0.0
    %384 = vmatprep.subr.mxu0 0.0
    %385 = vmatpush2.xpose.msra.mxu0 0.0
    %386 = vmatprep.subr.mxu0 0.0
    %387 = vmatpush2.xpose.msra.mxu0 0.0
    %388 = vmatprep.subr.mxu0 0.0
    %389 = vmatpush2.xpose.msra.mxu0 0.0
    %390 = vmatprep.subr.mxu0 0.0
    %391 = vmatpush2.xpose.msra.mxu0 0.0
    %392 = vmatprep.subr.mxu0 0.0
    %393 = vmatpush2.xpose.msra.mxu0 0.0
    %394 = vmatprep.subr.mxu0 0.0
    %395 = vmatpush2.xpose.msra.mxu0 0.0
    %396 = vmatprep.mubr.f32.mxu0 %v329
    %397 = vmatmul.mubr.f32.gmra.mxu0 %v325
    %v398 = vpop.f32.mrf.mxu0
    %v399 = vadd.f32 %v320, %v398
    %v400 = vpop.f32.mrf.mxu0
    %401 = vdwg.mxu0
    %v402 = vand.u32 2147483647, %v399
    %v403 = vsub.f32 0.0, %v402
    %v404 = vmul.f32 %v403, 1.442695
    %v405 = vpow.pop %v404
    %vm406 = vcmp.ge.f32.partialorder %v399, 0.0
    %v407 = vadd.f32 %v405, 1.0
    %v408 = vrcp.pop %v407
    %v409 = vmul.f32 1.0, %v408
    %v410 = vmul.f32 %v405, %v408
    %v411 = vsel %vm406, %v409, %v410
    %vm412 = vcmask 57344
    %413 = vst.msk [vmem:[#allocation9] sm:$0x1] %vm412, %v411
    // Predicated region
    $region42: #{tpu_custom_call.1} parent=1 // pred_check
      _
    $region43: #{tpu_custom_call.1} parent=1 // pred_check_branch
      %415 = sbr.rel (0) target = $region45
    $region44: #{tpu_custom_call.1} parent=1 // pred_region
      %s417 = ssub.s32 16, 16
      %418 = vsyncadd [#allocation5], %s417
      %s420 = sshll.u32 [#allocation9], 4
      %s421 = int_to_ptr.vmem [resolvable:$true] %s420
      %423 = dma.vmem_to_hbm [thread:$0]  %s421, 16, %s7, [#allocation5]
    $region45: #{tpu_custom_call.1} parent=1 // pred_fallthru
      _
    // Predicated region
    $region46: #{tpu_custom_call.1} parent=1 // pred_check
      _
    $region47: #{tpu_custom_call.1} parent=1 // pred_check_branch
      %425 = sbr.rel (0) target = $region49
    $region48: #{tpu_custom_call.1} parent=1 // pred_region
      %426 = dma.done [#allocation5], 16
    $region49: #{tpu_custom_call.1} parent=1 // pred_fallthru
      _
    %427 = vsyncpa [#allocation4], 1
    %428 = vsyncpa [#allocation7], 1
    %429 = vsyncpa [#allocation5], 1

</llo_original>
